<compile_context>
chip_gen: v6e
topology: v6e:2x2x1
jax: 0.10.0
libtpu: 0.0.40
codegen_flags: <defaults>
</compile_context>

<pallas_src>
import functools

import jax
import jax.numpy as jnp
from jax import lax
from jax.experimental import pallas as pl
from jax.experimental.pallas import tpu as pltpu

NEG_SLOPE = 0.2   # LeakyReLU slope
EPS = 1e-5        # BatchNorm eps (PyTorch default)


def _round_up(x, m):
    return (x + m - 1) // m * m


# ---------------------------------------------------------------------------
# Kernel 1: LeakyReLU + conv-as-matmul (bf16 MXU, f32 accumulator) + per-tile
#           partial channel sums / sums-of-squares.
#   grid = (grid_m, grid_n, grid_k);  m, n parallel;  k arbitrary (reduction).
#   Zero-padded rows/cols contribute exactly 0 to the stats, so no masking.
# ---------------------------------------------------------------------------
def _conv_stats_kernel(p_ref, w_ref, y_ref, sum_ref, ssq_ref, acc_ref):
    k = pl.program_id(2)
    nk = pl.num_programs(2)

    @pl.when(k == 0)
    def _():
        acc_ref[...] = jnp.zeros_like(acc_ref)

    x = p_ref[...]                                   # bf16 (tile_m, tile_k)
    x = jnp.where(x >= 0, x, NEG_SLOPE * x)          # LeakyReLU, free under MXU
    acc_ref[...] += jnp.dot(x, w_ref[...], preferred_element_type=jnp.float32)

    @pl.when(k == nk - 1)
    def _():
        y = acc_ref[...]                             # f32 (tile_m, tile_n)
        y_ref[...] = y.astype(y_ref.dtype)
        # per-(m,n)-block partial stats -> written to this block's own slot,
        # reduced over m outside (keeps the m axis truly parallel).
        sum_ref[0] = jnp.sum(y, axis=0, keepdims=True)
        ssq_ref[0] = jnp.sum(y * y, axis=0, keepdims=True)


# ---------------------------------------------------------------------------
# Kernel 2: BatchNorm apply as a single FMA with pre-folded scale/shift.
# ---------------------------------------------------------------------------
def _bn_apply_kernel(y_ref, scale_ref, shift_ref, o_ref):
    o_ref[...] = y_ref[...].astype(jnp.float32) * scale_ref[...] + shift_ref[...]


# ---------------------------------------------------------------------------
# Wrapper glue.
# ---------------------------------------------------------------------------
def _im2col_nhwc(x_nhwc, Hout, Wout):
    """im2col for k=4, s=2, p=1 on NHWC input.  K ordered (kh, kw, c)."""
    N, _, _, C = x_nhwc.shape
    xp = jnp.pad(x_nhwc, ((0, 0), (1, 1), (1, 1), (0, 0)))
    cols = []
    for kh in range(4):
        for kw in range(4):
            cols.append(xp[:, kh:kh + 2 * Hout:2, kw:kw + 2 * Wout:2, :])
    p = jnp.stack(cols, axis=3)                      # (N, Hout, Wout, 16, C)
    return p.reshape(N * Hout * Wout, 16 * C)


def down_forward_nhwc(x_nhwc, weight, gamma, beta, *, inner=False,
                      tile_m=512, tile_n=256, tile_k=1024,
                      vmem_limit_bytes=32 * 1024 * 1024):
    """Core NHWC path.  weight is the PyTorch (Cout, Cin, 4, 4) tensor."""
    N, H, W, Cin = x_nhwc.shape
    Cout = weight.shape[0]
    Hout, Wout = H // 2, W // 2
    M = N * Hout * Wout
    K = Cin * 16

    # ---- tile sizing (clamped to problem, MXU / lane aligned) ----
    tile_m = min(tile_m, _round_up(M, 8))
    tile_n = min(tile_n, _round_up(Cout, 128))
    tile_k = min(tile_k, _round_up(K, 128))
    Mp = _round_up(M, tile_m)
    Co_pad = _round_up(Cout, tile_n)
    Kp = _round_up(K, tile_k)
    grid_m, grid_n, grid_k = Mp // tile_m, Co_pad // tile_n, Kp // tile_k

    # ---- operand prep: bf16, lane-dense, zero padded ----
    xb = x_nhwc.astype(jnp.bfloat16)
    patches = _im2col_nhwc(xb, Hout, Wout)                         # (M, K) bf16
    patches = jnp.pad(patches, ((0, Mp - M), (0, Kp - K)))

    wmat = weight.transpose(2, 3, 1, 0).reshape(K, Cout)           # (kh,kw,cin) x cout
    wmat = jnp.pad(wmat, ((0, Kp - K), (0, Co_pad - Cout))).astype(jnp.bfloat16)

    y_dtype = jnp.float32 if inner else jnp.bfloat16

    y, psum, pssq = pl.pallas_call(
        _conv_stats_kernel,
        out_shape=(
            jax.ShapeDtypeStruct((Mp, Co_pad), y_dtype),
            jax.ShapeDtypeStruct((grid_m, 1, Co_pad), jnp.float32),
            jax.ShapeDtypeStruct((grid_m, 1, Co_pad), jnp.float32),
        ),
        grid=(grid_m, grid_n, grid_k),
        in_specs=[
            pl.BlockSpec((tile_m, tile_k), lambda m, n, k: (m, k)),
            pl.BlockSpec((tile_k, tile_n), lambda m, n, k: (k, n)),
        ],
        out_specs=(
            pl.BlockSpec((tile_m, tile_n), lambda m, n, k: (m, n)),
            pl.BlockSpec((1, 1, tile_n), lambda m, n, k: (m, 0, n)),
            pl.BlockSpec((1, 1, tile_n), lambda m, n, k: (m, 0, n)),
        ),
        scratch_shapes=[pltpu.VMEM((tile_m, tile_n), jnp.float32)],
        compiler_params=pltpu.CompilerParams(
            dimension_semantics=("parallel", "parallel", "arbitrary"),
            vmem_limit_bytes=vmem_limit_bytes,
        ),
    )(patches, wmat)

    if inner:
        return y[:M, :Cout].reshape(N, Hout, Wout, Cout)

    # ---- fold BN into (scale, shift): tiny (1, Cout) computation done once ----
    s = jnp.sum(psum, axis=0).reshape(1, Co_pad)
    q = jnp.sum(pssq, axis=0).reshape(1, Co_pad)
    mean = s / M                                                    # true M (pads = 0)
    var = jnp.maximum(q / M - mean * mean, 0.0)                     # clamp cancellation
    inv = lax.rsqrt(var + EPS)
    g = jnp.pad(gamma.reshape(1, -1), ((0, 0), (0, Co_pad - Cout)))
    b = jnp.pad(beta.reshape(1, -1), ((0, 0), (0, Co_pad - Cout)))
    scale = (g * inv).astype(jnp.float32)
    shift = (b - mean * g * inv).astype(jnp.float32)

    out = pl.pallas_call(
        _bn_apply_kernel,
        out_shape=jax.ShapeDtypeStruct((Mp, Co_pad), jnp.float32),
        grid=(grid_m, grid_n),
        in_specs=[
            pl.BlockSpec((tile_m, tile_n), lambda m, n: (m, n)),
            pl.BlockSpec((1, tile_n), lambda m, n: (0, n)),
            pl.BlockSpec((1, tile_n), lambda m, n: (0, n)),
        ],
        out_specs=pl.BlockSpec((tile_m, tile_n), lambda m, n: (m, n)),
        compiler_params=pltpu.CompilerParams(
            dimension_semantics=("parallel", "parallel"),
            vmem_limit_bytes=vmem_limit_bytes,
        ),
    )(y, scale, shift)

    return out[:M, :Cout].reshape(N, Hout, Wout, Cout)


@functools.partial(jax.jit, static_argnames=("inner",))
def down_forward(x, weight, gamma, beta, *, inner=False):
    """PyTorch-facing NCHW interface of the Down block."""
    x_nhwc = jnp.transpose(x, (0, 2, 3, 1))
    out_nhwc = down_forward_nhwc(x_nhwc, weight, gamma, beta, inner=inner)
    return jnp.transpose(out_nhwc, (0, 3, 1, 2))


# ---------------------------------------------------------------------------
# References for correctness checking.
# ---------------------------------------------------------------------------
def down_reference_f32(x, weight, gamma, beta, *, inner=False):
    """Exact f32 semantics of the PyTorch module (loose sanity check)."""
    a = jnp.where(x >= 0, x, NEG_SLOPE * x)
    y = lax.conv_general_dilated(a, weight, (2, 2), ((1, 1), (1, 1)),
                                 dimension_numbers=("NCHW", "OIHW", "NCHW"))
    if inner:
        return y
    mean = jnp.mean(y, axis=(0, 2, 3), keepdims=True)
    var = jnp.mean((y - mean) ** 2, axis=(0, 2, 3), keepdims=True)
    return ((y - mean) * lax.rsqrt(var + EPS) * gamma.reshape(1, -1, 1, 1)
            + beta.reshape(1, -1, 1, 1))


def down_reference_matched(x, weight, gamma, beta, *, inner=False):
    """Reference that mirrors the kernel's bf16-operand / bf16-intermediate numerics."""
    xb = x.astype(jnp.bfloat16)
    a = jnp.where(xb >= 0, xb, NEG_SLOPE * xb)
    y = lax.conv_general_dilated(a, weight.astype(jnp.bfloat16), (2, 2), ((1, 1), (1, 1)),
                                 dimension_numbers=("NCHW", "OIHW", "NCHW"),
                                 preferred_element_type=jnp.float32)
    if inner:
        return y
    mean = jnp.mean(y, axis=(0, 2, 3))
    var = jnp.maximum(jnp.mean(y * y, axis=(0, 2, 3)) - mean * mean, 0.0)
    inv = lax.rsqrt(var + EPS)
    scale = (gamma * inv).reshape(1, -1, 1, 1)
    shift = (beta - mean * gamma * inv).reshape(1, -1, 1, 1)
    yb = y.astype(jnp.bfloat16).astype(jnp.float32)
    return yb * scale + shift


# ---------------------------------------------------------------------------
# Demo / self-check.
# ---------------------------------------------------------------------------
if __name__ == "__main__":
    root = jax.random.PRNGKey(0)

    def run_case(cid, N, Cin, Cout, H, W, inner):
        k0, k1, k2, k3 = jax.random.split(jax.random.fold_in(root, cid), 4)
        x = jax.random.normal(k0, (N, Cin, H, W), dtype=jnp.float32)
        w = jax.random.normal(k1, (Cout, Cin, 4, 4), dtype=jnp.float32) / (Cin * 16) ** 0.5
        gamma = 1.0 + 0.1 * jax.random.normal(k2, (Cout,), dtype=jnp.float32)
        beta = 0.1 * jax.random.normal(k3, (Cout,), dtype=jnp.float32)

        out = jax.block_until_ready(down_forward(x, w, gamma, beta, inner=inner))
        assert out.shape == (N, Cout, H // 2, W // 2), f"case {cid}: bad shape {out.shape}"

        ref_m = down_reference_matched(x, w, gamma, beta, inner=inner)
        ref_f = down_reference_f32(x, w, gamma, beta, inner=inner)
        assert jnp.allclose(out, ref_m, atol=3e-2, rtol=3e-2), f"case {cid}: mismatch (matched ref)"
        assert jnp.allclose(out, ref_f, atol=2e-1, rtol=2e-1), f"case {cid}: mismatch (f32 ref)"

    # 1) small shape (matches the module-scale demo): grid (1,1,1)
    run_case(0, N=2, Cin=4, Cout=8, H=16, W=16, inner=False)
    # 2) deeper UNet-like stage: exercises M/Cout/K tiling, grid (4,2,2)
    run_case(1, N=2, Cin=128, Cout=512, H=64, W=64, inner=False)
    # 3) inner=True (no BatchNorm), f32 conv output
    run_case(2, N=2, Cin=4, Cout=8, H=16, W=16, inner=True)

    print("KERNEL_OK")
</pallas_src>

<mosaic_0001>
module attributes {stable_mosaic.version = 11 : i64} {
  func.func @_conv_stats_kernel(%arg0: i32, %arg1: i32, %arg2: i32, %arg3: memref<128x128xbf16, #tpu.memory_space<vmem>>, %arg4: memref<128x128xbf16, #tpu.memory_space<vmem>>, %arg5: memref<128x128xbf16, #tpu.memory_space<vmem>>, %arg6: memref<1x1x128xf32, #tpu.memory_space<vmem>>, %arg7: memref<1x1x128xf32, #tpu.memory_space<vmem>>, %arg8: memref<128x128xf32, #tpu.memory_space<vmem>>) attributes {dimension_semantics = [#tpu.dimension_semantics<parallel>, #tpu.dimension_semantics<parallel>, #tpu.dimension_semantics<arbitrary>], iteration_bounds = array<i64: 1, 1, 1>, scalar_prefetch = 0 : i64, scratch_operands = 1 : i64, tpu.core_type = #tpu.core_type<tc>, window_params = [{transform_indices = @transform_0, window_bounds = array<i64: 128, 128>}, {transform_indices = @transform_1, window_bounds = array<i64: 128, 128>}, {transform_indices = @transform_2, window_bounds = array<i64: 128, 128>}, {transform_indices = @transform_3, window_bounds = array<i64: 1, 1, 128>}, {transform_indices = @transform_4, window_bounds = array<i64: 1, 1, 128>}]} {
    %c0_i32 = arith.constant 0 : i32
    %0 = arith.cmpi eq, %arg2, %c0_i32 : i32
    %1 = arith.extui %0 : i1 to i32
    %c0_i32_0 = arith.constant 0 : i32
    %2 = arith.cmpi ne, %1, %c0_i32_0 : i32
    scf.if %2 {
      %cst_12 = arith.constant 0.000000e+00 : f32
      %17 = vector.broadcast %cst_12 : f32 to vector<128x128xf32>
      %c0_13 = arith.constant 0 : index
      %c0_14 = arith.constant 0 : index
      %18 = vector.load %arg8[%c0_13, %c0_14] : memref<128x128xf32, #tpu.memory_space<vmem>>, vector<128x128xf32>
      tpu.vector_store %arg8[%c0_13, %c0_14], %17 {strides = array<i32>} : memref<128x128xf32, #tpu.memory_space<vmem>>, vector<128x128xf32>,
    } else {
    }
    %c0 = arith.constant 0 : index
    %c0_1 = arith.constant 0 : index
    %3 = vector.load %arg3[%c0, %c0_1] : memref<128x128xbf16, #tpu.memory_space<vmem>>, vector<128x128xbf16>
    %cst = arith.constant 0.000000e+00 : bf16
    %4 = vector.broadcast %cst : bf16 to vector<128x128xbf16>
    %5 = arith.cmpf oge, %3, %4 : vector<128x128xbf16>
    %cst_2 = arith.constant 2.001950e-01 : bf16
    %6 = vector.broadcast %cst_2 : bf16 to vector<128x128xbf16>
    %7 = arith.mulf %6, %3 : vector<128x128xbf16>
    %8 = arith.select %5, %3, %7 : vector<128x128xi1>, vector<128x128xbf16>
    %c0_3 = arith.constant 0 : index
    %c0_4 = arith.constant 0 : index
    %9 = vector.load %arg8[%c0_3, %c0_4] : memref<128x128xf32, #tpu.memory_space<vmem>>, vector<128x128xf32>
    %c0_5 = arith.constant 0 : index
    %c0_6 = arith.constant 0 : index
    %10 = vector.load %arg4[%c0_5, %c0_6] : memref<128x128xbf16, #tpu.memory_space<vmem>>, vector<128x128xbf16>
    %cst_7 = arith.constant dense<0.000000e+00> : vector<128x128xf32>
    %11 = tpu.matmul %8, %10, %cst_7 {dimension_numbers = #tpu.dot_dimension_numbers<[1], [0], [0], [1], [0, 0, 1, 1], [], []>} : vector<128x128xbf16>, vector<128x128xbf16>, vector<128x128xf32> -> vector<128x128xf32>
    %12 = arith.addf %9, %11 : vector<128x128xf32>
    %c0_8 = arith.constant 0 : index
    %c0_9 = arith.constant 0 : index
    %13 = vector.load %arg8[%c0_8, %c0_9] : memref<128x128xf32, #tpu.memory_space<vmem>>, vector<128x128xf32>
    tpu.vector_store %arg8[%c0_8, %c0_9], %12 {strides = array<i32>} : memref<128x128xf32, #tpu.memory_space<vmem>>, vector<128x128xf32>,
    %c0_i32_10 = arith.constant 0 : i32
    %14 = arith.cmpi eq, %arg2, %c0_i32_10 : i32
    %15 = arith.extui %14 : i1 to i32
    %c0_i32_11 = arith.constant 0 : i32
    %16 = arith.cmpi ne, %15, %c0_i32_11 : i32
    scf.if %16 {
      %c0_12 = arith.constant 0 : index
      %c0_13 = arith.constant 0 : index
      %17 = vector.load %arg8[%c0_12, %c0_13] : memref<128x128xf32, #tpu.memory_space<vmem>>, vector<128x128xf32>
      %18 = arith.truncf %17 : vector<128x128xf32> to vector<128x128xbf16>
      %c0_14 = arith.constant 0 : index
      %c0_15 = arith.constant 0 : index
      %19 = vector.load %arg5[%c0_14, %c0_15] : memref<128x128xbf16, #tpu.memory_space<vmem>>, vector<128x128xbf16>
      tpu.vector_store %arg5[%c0_14, %c0_15], %18 {strides = array<i32>} : memref<128x128xbf16, #tpu.memory_space<vmem>>, vector<128x128xbf16>,
      %cst_16 = arith.constant dense<0.000000e+00> : vector<128xf32>
      %20 = vector.multi_reduction <add>, %17, %cst_16 [0] : vector<128x128xf32> to vector<128xf32>
      %21 = vector.shape_cast %20 : vector<128xf32> to vector<1x128xf32>
      %c0_17 = arith.constant 0 : index
      %c0_18 = arith.constant 0 : index
      %c0_19 = arith.constant 0 : index
      %22 = vector.load %arg6[%c0_17, %c0_18, %c0_19] : memref<1x1x128xf32, #tpu.memory_space<vmem>>, vector<1x1x128xf32>
      %23 = vector.shape_cast %22 : vector<1x1x128xf32> to vector<1x128xf32>
      %24 = vector.shape_cast %21 : vector<1x128xf32> to vector<1x1x128xf32>
      tpu.vector_store %arg6[%c0_17, %c0_18, %c0_19], %24 {strides = array<i32>} : memref<1x1x128xf32, #tpu.memory_space<vmem>>, vector<1x1x128xf32>,
      %25 = arith.mulf %17, %17 : vector<128x128xf32>
      %cst_20 = arith.constant dense<0.000000e+00> : vector<128xf32>
      %26 = vector.multi_reduction <add>, %25, %cst_20 [0] : vector<128x128xf32> to vector<128xf32>
      %27 = vector.shape_cast %26 : vector<128xf32> to vector<1x128xf32>
      %c0_21 = arith.constant 0 : index
      %c0_22 = arith.constant 0 : index
      %c0_23 = arith.constant 0 : index
      %28 = vector.load %arg7[%c0_21, %c0_22, %c0_23] : memref<1x1x128xf32, #tpu.memory_space<vmem>>, vector<1x1x128xf32>
      %29 = vector.shape_cast %28 : vector<1x1x128xf32> to vector<1x128xf32>
      %30 = vector.shape_cast %27 : vector<1x128xf32> to vector<1x1x128xf32>
      tpu.vector_store %arg7[%c0_21, %c0_22, %c0_23], %30 {strides = array<i32>} : memref<1x1x128xf32, #tpu.memory_space<vmem>>, vector<1x1x128xf32>,
    } else {
    }
    return
  }
  func.func @transform_0(%arg0: i32, %arg1: i32, %arg2: i32) -> (i32, i32) {
    %c0_i32 = arith.constant 0 : i32
    return %arg0, %arg2 : i32, i32
  }
  func.func @transform_1(%arg0: i32, %arg1: i32, %arg2: i32) -> (i32, i32) {
    %c0_i32 = arith.constant 0 : i32
    return %arg2, %arg1 : i32, i32
  }
  func.func @transform_2(%arg0: i32, %arg1: i32, %arg2: i32) -> (i32, i32) {
    %c0_i32 = arith.constant 0 : i32
    return %arg0, %arg1 : i32, i32
  }
  func.func @transform_3(%arg0: i32, %arg1: i32, %arg2: i32) -> (i32, i32, i32) {
    %c0_i32 = arith.constant 0 : i32
    %c0_i32_0 = arith.constant 0 : i32
    return %arg0, %c0_i32, %arg1 : i32, i32, i32
  }
  func.func @transform_4(%arg0: i32, %arg1: i32, %arg2: i32) -> (i32, i32, i32) {
    %c0_i32 = arith.constant 0 : i32
    %c0_i32_0 = arith.constant 0 : i32
    return %arg0, %c0_i32, %arg1 : i32, i32, i32
  }
}

module attributes {stable_mosaic.version = 11 : i64} {
  func.func @_bn_apply_kernel(%arg0: i32, %arg1: i32, %arg2: memref<128x128xbf16, #tpu.memory_space<vmem>>, %arg3: memref<1x128xf32, #tpu.memory_space<vmem>>, %arg4: memref<1x128xf32, #tpu.memory_space<vmem>>, %arg5: memref<128x128xf32, #tpu.memory_space<vmem>>) attributes {dimension_semantics = [#tpu.dimension_semantics<parallel>, #tpu.dimension_semantics<parallel>], iteration_bounds = array<i64: 1, 1>, scalar_prefetch = 0 : i64, scratch_operands = 0 : i64, tpu.core_type = #tpu.core_type<tc>, window_params = [{transform_indices = @transform_0, window_bounds = array<i64: 128, 128>}, {transform_indices = @transform_1, window_bounds = array<i64: 1, 128>}, {transform_indices = @transform_2, window_bounds = array<i64: 1, 128>}, {transform_indices = @transform_3, window_bounds = array<i64: 128, 128>}]} {
    %c0 = arith.constant 0 : index
    %c0_0 = arith.constant 0 : index
    %0 = vector.load %arg2[%c0, %c0_0] : memref<128x128xbf16, #tpu.memory_space<vmem>>, vector<128x128xbf16>
    %1 = arith.extf %0 : vector<128x128xbf16> to vector<128x128xf32>
    %c0_1 = arith.constant 0 : index
    %c0_2 = arith.constant 0 : index
    %2 = vector.load %arg3[%c0_1, %c0_2] : memref<1x128xf32, #tpu.memory_space<vmem>>, vector<1x128xf32>
    %3 = vector.broadcast %2 : vector<1x128xf32> to vector<128x128xf32>
    %4 = arith.mulf %1, %3 : vector<128x128xf32>
    %c0_3 = arith.constant 0 : index
    %c0_4 = arith.constant 0 : index
    %5 = vector.load %arg4[%c0_3, %c0_4] : memref<1x128xf32, #tpu.memory_space<vmem>>, vector<1x128xf32>
    %6 = vector.broadcast %5 : vector<1x128xf32> to vector<128x128xf32>
    %7 = arith.addf %4, %6 : vector<128x128xf32>
    %c0_5 = arith.constant 0 : index
    %c0_6 = arith.constant 0 : index
    %8 = vector.load %arg5[%c0_5, %c0_6] : memref<128x128xf32, #tpu.memory_space<vmem>>, vector<128x128xf32>
    tpu.vector_store %arg5[%c0_5, %c0_6], %7 {strides = array<i32>} : memref<128x128xf32, #tpu.memory_space<vmem>>, vector<128x128xf32>,
    return
  }
  func.func @transform_0(%arg0: i32, %arg1: i32) -> (i32, i32) {
    %c0_i32 = arith.constant 0 : i32
    return %arg0, %arg1 : i32, i32
  }
  func.func @transform_1(%arg0: i32, %arg1: i32) -> (i32, i32) {
    %c0_i32 = arith.constant 0 : i32
    %c0_i32_0 = arith.constant 0 : i32
    return %c0_i32, %arg1 : i32, i32
  }
  func.func @transform_2(%arg0: i32, %arg1: i32) -> (i32, i32) {
    %c0_i32 = arith.constant 0 : i32
    %c0_i32_0 = arith.constant 0 : i32
    return %c0_i32, %arg1 : i32, i32
  }
  func.func @transform_3(%arg0: i32, %arg1: i32) -> (i32, i32) {
    %c0_i32 = arith.constant 0 : i32
    return %arg0, %arg1 : i32, i32
  }
}

</mosaic_0001>

<llo_original>
// kernel: down_forward.3
$region0: #{down_forward.3}
  #allocation0 [shape = 'u32[]', space=smem, size = 0x4, offset = 0x4, fixed_abs, tag = 'smem constant byte address 0x4 - core index']
  #allocation1 [shape = 'u32[144,128]{1,0:T(1,128)}', space=vmem, size = 0x12000, scoped, tag = 'internal scratch']
  %s0 = inlined_call_operand.vmem [shape: bf16[128,128], index: 0, kind: input, shape index: {}]
  %s1 = inlined_call_operand.vmem [shape: f32[1,128], index: 1, kind: input, shape index: {}]
  %s2 = inlined_call_operand.vmem [shape: f32[1,128], index: 2, kind: input, shape index: {}]
  %s3 = inlined_call_operand.vmem [shape: f32[128,128], index: 3, kind: output, shape index: {}]
  %s4 = sld [smem:[#allocation0]]
  $region22: #{down_forward.3} parent=0
    _
  %s6 = ssub.s32 1, %s4
  %s7 = scalar_select 0, %s6, %s4
  // Predicated region
  $region2: #{down_forward.3} parent=0 // pred_check
    _
  $region3: #{down_forward.3} parent=0 // pred_check_branch
    %9 = sbr.rel (0) target = $region5
  $region4: #{down_forward.3} parent=0 // pred_region
    _
  $region5: #{down_forward.3} parent=0 // pred_fallthru
    _
  // Predicated region
  $region6: #{down_forward.3} parent=0 // pred_check
    _
  $region7: #{down_forward.3} parent=0 // pred_check_branch
    %11 = sbr.rel (0) target = $region9
  $region8: #{down_forward.3} parent=0 // pred_region
    _
  $region9: #{down_forward.3} parent=0 // pred_fallthru
    _
  // Predicated region
  $region10: #{down_forward.3} parent=0 // pred_check
    _
  $region11: #{down_forward.3} parent=0 // pred_check_branch
    %13 = sbr.rel (0) target = $region13
  $region12: #{down_forward.3} parent=0 // pred_region
    _
  $region13: #{down_forward.3} parent=0 // pred_fallthru
    _
  %v14 = vld [vmem:[%s0] sm:$0xf]
  %v15 = vld [vmem:[%s0 + $0x4] sm:$0xf]
  %v16 = vld [vmem:[%s0 + $0x8] sm:$0xf]
  %v17 = vld [vmem:[%s0 + $0xc] sm:$0xf]
  %v18 = vld [vmem:[%s0 + $0x10] sm:$0xf]
  %v19 = vld [vmem:[%s0 + $0x14] sm:$0xf]
  %v20 = vld [vmem:[%s0 + $0x18] sm:$0xf]
  %v21 = vld [vmem:[%s0 + $0x1c] sm:$0xf]
  %v22 = vld [vmem:[%s0 + $0x20] sm:$0xf]
  %v23 = vld [vmem:[%s0 + $0x24] sm:$0xf]
  %v24 = vld [vmem:[%s0 + $0x28] sm:$0xf]
  %v25 = vld [vmem:[%s0 + $0x2c] sm:$0xf]
  %v26 = vld [vmem:[%s0 + $0x30] sm:$0xf]
  %v27 = vld [vmem:[%s0 + $0x34] sm:$0xf]
  %v28 = vld [vmem:[%s0 + $0x38] sm:$0xf]
  %v29 = vld [vmem:[%s0 + $0x3c] sm:$0xf]
  %v30 = vunpack.c.l.bf16 %v14
  %v31 = vunpack.c.l.bf16 %v15
  %v32 = vunpack.c.l.bf16 %v16
  %v33 = vunpack.c.l.bf16 %v17
  %v34 = vunpack.c.l.bf16 %v18
  %v35 = vunpack.c.l.bf16 %v19
  %v36 = vunpack.c.l.bf16 %v20
  %v37 = vunpack.c.l.bf16 %v21
  %v38 = vunpack.c.l.bf16 %v22
  %v39 = vunpack.c.l.bf16 %v23
  %v40 = vunpack.c.l.bf16 %v24
  %v41 = vunpack.c.l.bf16 %v25
  %v42 = vunpack.c.l.bf16 %v26
  %v43 = vunpack.c.l.bf16 %v27
  %v44 = vunpack.c.l.bf16 %v28
  %v45 = vunpack.c.l.bf16 %v29
  %v46 = vld [vmem:[%s1] sm:$0x1]
  %v48 = vlaneseq
  %v49 = vshrl.u32 %v48, 7
  %v50 = vsub.s32 0, %v49
  %v51 = vrot.slane %v46, %v50
  %v53 = vmul.f32 %v30, %v51
  %v54 = vmul.f32 %v31, %v51
  %v55 = vmul.f32 %v32, %v51
  %v56 = vmul.f32 %v33, %v51
  %v57 = vmul.f32 %v34, %v51
  %v58 = vmul.f32 %v35, %v51
  %v59 = vmul.f32 %v36, %v51
  %v60 = vmul.f32 %v37, %v51
  %v61 = vmul.f32 %v38, %v51
  %v62 = vmul.f32 %v39, %v51
  %v63 = vmul.f32 %v40, %v51
  %v64 = vmul.f32 %v41, %v51
  %v65 = vmul.f32 %v42, %v51
  %v66 = vmul.f32 %v43, %v51
  %v67 = vmul.f32 %v44, %v51
  %v68 = vmul.f32 %v45, %v51
  %v69 = vld [vmem:[%s2] sm:$0x1]
  %v71 = vlaneseq
  %v72 = vshrl.u32 %v71, 7
  %v73 = vsub.s32 0, %v72
  %v74 = vrot.slane %v69, %v73
  %v76 = vadd.f32 %v53, %v74
  %v77 = vadd.f32 %v54, %v74
  %v78 = vadd.f32 %v55, %v74
  %v79 = vadd.f32 %v56, %v74
  %v80 = vadd.f32 %v57, %v74
  %v81 = vadd.f32 %v58, %v74
  %v82 = vadd.f32 %v59, %v74
  %v83 = vadd.f32 %v60, %v74
  %v84 = vadd.f32 %v61, %v74
  %v85 = vadd.f32 %v62, %v74
  %v86 = vadd.f32 %v63, %v74
  %v87 = vadd.f32 %v64, %v74
  %v88 = vadd.f32 %v65, %v74
  %v89 = vadd.f32 %v66, %v74
  %v90 = vadd.f32 %v67, %v74
  %v91 = vadd.f32 %v68, %v74
  %92 = vst [vmem:[%s3] sm:$0xff] %v76
  %93 = vst [vmem:[%s3 + $0x8] sm:$0xff] %v77
  %94 = vst [vmem:[%s3 + $0x10] sm:$0xff] %v78
  %95 = vst [vmem:[%s3 + $0x18] sm:$0xff] %v79
  %96 = vst [vmem:[%s3 + $0x20] sm:$0xff] %v80
  %97 = vst [vmem:[%s3 + $0x28] sm:$0xff] %v81
  %98 = vst [vmem:[%s3 + $0x30] sm:$0xff] %v82
  %99 = vst [vmem:[%s3 + $0x38] sm:$0xff] %v83
  %100 = vst [vmem:[%s3 + $0x40] sm:$0xff] %v84
  %101 = vst [vmem:[%s3 + $0x48] sm:$0xff] %v85
  %102 = vst [vmem:[%s3 + $0x50] sm:$0xff] %v86
  %103 = vst [vmem:[%s3 + $0x58] sm:$0xff] %v87
  %104 = vst [vmem:[%s3 + $0x60] sm:$0xff] %v88
  %105 = vst [vmem:[%s3 + $0x68] sm:$0xff] %v89
  %106 = vst [vmem:[%s3 + $0x70] sm:$0xff] %v90
  %107 = vst [vmem:[%s3 + $0x78] sm:$0xff] %v91
  // Predicated region
  $region14: #{down_forward.3} parent=0 // pred_check
    _
  $region15: #{down_forward.3} parent=0 // pred_check_branch
    %109 = sbr.rel (0) target = $region17
  $region16: #{down_forward.3} parent=0 // pred_region
    _
  $region17: #{down_forward.3} parent=0 // pred_fallthru
    _
  // Predicated region
  $region18: #{down_forward.3} parent=0 // pred_check
    _
  $region19: #{down_forward.3} parent=0 // pred_check_branch
    %111 = sbr.rel (0) target = $region21
  $region20: #{down_forward.3} parent=0 // pred_region
    _
  $region21: #{down_forward.3} parent=0 // pred_fallthru
    _

// kernel: down_forward.2
$region0: #{down_forward.2}
  #allocation0 [shape = 'u32[]', space=smem, size = 0x4, offset = 0x4, fixed_abs, tag = 'smem constant byte address 0x4 - core index']
  #allocation1 [shape = 'u32[144,128]{1,0:T(1,128)}', space=vmem, size = 0x12000, scoped, tag = 'internal scratch']
  #allocation2 [shape = 'f32[128,128]{1,0:T(8,128)}', space=vmem, size = 0x10000, scoped, tag = 'scratch operand']
  %s0 = inlined_call_operand.vmem [shape: bf16[128,128], index: 0, kind: input, shape index: {}]
  %s1 = inlined_call_operand.vmem [shape: bf16[128,128], index: 1, kind: input, shape index: {}]
  %s2 = inlined_call_operand.vmem [shape: bf16[128,128], index: 2, kind: output, shape index: {0}]
  %s3 = inlined_call_operand.vmem [shape: f32[1,1,128], index: 3, kind: output, shape index: {1}]
  %s4 = inlined_call_operand.vmem [shape: f32[1,1,128], index: 4, kind: output, shape index: {2}]
  %5 = xla_tuple %s2, %s3, %s4
  %s6 = sld [smem:[#allocation0]]
  $region42: #{down_forward.2} parent=0
    _
  %s8 = ssub.s32 1, %s6
  %s9 = scalar_select 0, %s8, %s6
  // Predicated region
  $region2: #{down_forward.2} parent=0 // pred_check
    _
  $region3: #{down_forward.2} parent=0 // pred_check_branch
    %11 = sbr.rel (0) target = $region5
  $region4: #{down_forward.2} parent=0 // pred_region
    _
  $region5: #{down_forward.2} parent=0 // pred_fallthru
    _
  // Predicated region
  $region6: #{down_forward.2} parent=0 // pred_check
    _
  $region7: #{down_forward.2} parent=0 // pred_check_branch
    %13 = sbr.rel (0) target = $region9
  $region8: #{down_forward.2} parent=0 // pred_region
    _
  $region9: #{down_forward.2} parent=0 // pred_fallthru
    _
  %p16 = scmp.eq.s32.totalorder 0, 0
  // Predicated region
  $region10: #{down_forward.2} parent=0 // pred_check
    %p17 = pneg %p16
  $region11: #{down_forward.2} parent=0 // pred_check_branch
    %19 = sbr.rel (%p17) target = $region13
  $region12: #{down_forward.2} parent=0 // pred_region
    %20 = vst [vmem:[#allocation2] sm:$0xff] 0.0
    %21 = vst [vmem:[#allocation2 + $0x8] sm:$0xff] 0.0
    %22 = vst [vmem:[#allocation2 + $0x10] sm:$0xff] 0.0
    %23 = vst [vmem:[#allocation2 + $0x18] sm:$0xff] 0.0
    %24 = vst [vmem:[#allocation2 + $0x20] sm:$0xff] 0.0
    %25 = vst [vmem:[#allocation2 + $0x28] sm:$0xff] 0.0
    %26 = vst [vmem:[#allocation2 + $0x30] sm:$0xff] 0.0
    %27 = vst [vmem:[#allocation2 + $0x38] sm:$0xff] 0.0
    %28 = vst [vmem:[#allocation2 + $0x40] sm:$0xff] 0.0
    %29 = vst [vmem:[#allocation2 + $0x48] sm:$0xff] 0.0
    %30 = vst [vmem:[#allocation2 + $0x50] sm:$0xff] 0.0
    %31 = vst [vmem:[#allocation2 + $0x58] sm:$0xff] 0.0
    %32 = vst [vmem:[#allocation2 + $0x60] sm:$0xff] 0.0
    %33 = vst [vmem:[#allocation2 + $0x68] sm:$0xff] 0.0
    %34 = vst [vmem:[#allocation2 + $0x70] sm:$0xff] 0.0
    %35 = vst [vmem:[#allocation2 + $0x78] sm:$0xff] 0.0
  $region13: #{down_forward.2} parent=0 // pred_fallthru
    _
  %v36 = vld [vmem:[%s0] sm:$0xf]
  %v37 = vld [vmem:[%s0 + $0x4] sm:$0xf]
  %v38 = vld [vmem:[%s0 + $0x8] sm:$0xf]
  %v39 = vld [vmem:[%s0 + $0xc] sm:$0xf]
  %v40 = vld [vmem:[%s0 + $0x10] sm:$0xf]
  %v41 = vld [vmem:[%s0 + $0x14] sm:$0xf]
  %v42 = vld [vmem:[%s0 + $0x18] sm:$0xf]
  %v43 = vld [vmem:[%s0 + $0x1c] sm:$0xf]
  %v44 = vld [vmem:[%s0 + $0x20] sm:$0xf]
  %v45 = vld [vmem:[%s0 + $0x24] sm:$0xf]
  %v46 = vld [vmem:[%s0 + $0x28] sm:$0xf]
  %v47 = vld [vmem:[%s0 + $0x2c] sm:$0xf]
  %v48 = vld [vmem:[%s0 + $0x30] sm:$0xf]
  %v49 = vld [vmem:[%s0 + $0x34] sm:$0xf]
  %v50 = vld [vmem:[%s0 + $0x38] sm:$0xf]
  %v51 = vld [vmem:[%s0 + $0x3c] sm:$0xf]
  %vm52 = vcmp.ge.bf16.partialorder %v36, 0
  %vm53 = vcmp.ge.bf16.partialorder %v37, 0
  %vm54 = vcmp.ge.bf16.partialorder %v38, 0
  %vm55 = vcmp.ge.bf16.partialorder %v39, 0
  %vm56 = vcmp.ge.bf16.partialorder %v40, 0
  %vm57 = vcmp.ge.bf16.partialorder %v41, 0
  %vm58 = vcmp.ge.bf16.partialorder %v42, 0
  %vm59 = vcmp.ge.bf16.partialorder %v43, 0
  %vm60 = vcmp.ge.bf16.partialorder %v44, 0
  %vm61 = vcmp.ge.bf16.partialorder %v45, 0
  %vm62 = vcmp.ge.bf16.partialorder %v46, 0
  %vm63 = vcmp.ge.bf16.partialorder %v47, 0
  %vm64 = vcmp.ge.bf16.partialorder %v48, 0
  %vm65 = vcmp.ge.bf16.partialorder %v49, 0
  %vm66 = vcmp.ge.bf16.partialorder %v50, 0
  %vm67 = vcmp.ge.bf16.partialorder %v51, 0
  %v68 = vmul.bf16 %v36, 1045249613
  %v69 = vmul.bf16 %v37, 1045249613
  %v70 = vmul.bf16 %v38, 1045249613
  %v71 = vmul.bf16 %v39, 1045249613
  %v72 = vmul.bf16 %v40, 1045249613
  %v73 = vmul.bf16 %v41, 1045249613
  %v74 = vmul.bf16 %v42, 1045249613
  %v75 = vmul.bf16 %v43, 1045249613
  %v76 = vmul.bf16 %v44, 1045249613
  %v77 = vmul.bf16 %v45, 1045249613
  %v78 = vmul.bf16 %v46, 1045249613
  %v79 = vmul.bf16 %v47, 1045249613
  %v80 = vmul.bf16 %v48, 1045249613
  %v81 = vmul.bf16 %v49, 1045249613
  %v82 = vmul.bf16 %v50, 1045249613
  %v83 = vmul.bf16 %v51, 1045249613
  %v84 = vsel %vm52, %v36, %v68
  %v85 = vsel %vm53, %v37, %v69
  %v86 = vsel %vm54, %v38, %v70
  %v87 = vsel %vm55, %v39, %v71
  %v88 = vsel %vm56, %v40, %v72
  %v89 = vsel %vm57, %v41, %v73
  %v90 = vsel %vm58, %v42, %v74
  %v91 = vsel %vm59, %v43, %v75
  %v92 = vsel %vm60, %v44, %v76
  %v93 = vsel %vm61, %v45, %v77
  %v94 = vsel %vm62, %v46, %v78
  %v95 = vsel %vm63, %v47, %v79
  %v96 = vsel %vm64, %v48, %v80
  %v97 = vsel %vm65, %v49, %v81
  %v98 = vsel %vm66, %v50, %v82
  %v99 = vsel %vm67, %v51, %v83
  %v100 = vld [vmem:[#allocation2] sm:$0xff]
  %v101 = vld [vmem:[#allocation2 + $0x8] sm:$0xff]
  %v102 = vld [vmem:[#allocation2 + $0x10] sm:$0xff]
  %v103 = vld [vmem:[#allocation2 + $0x18] sm:$0xff]
  %v104 = vld [vmem:[#allocation2 + $0x20] sm:$0xff]
  %v105 = vld [vmem:[#allocation2 + $0x28] sm:$0xff]
  %v106 = vld [vmem:[#allocation2 + $0x30] sm:$0xff]
  %v107 = vld [vmem:[#allocation2 + $0x38] sm:$0xff]
  %v108 = vld [vmem:[#allocation2 + $0x40] sm:$0xff]
  %v109 = vld [vmem:[#allocation2 + $0x48] sm:$0xff]
  %v110 = vld [vmem:[#allocation2 + $0x50] sm:$0xff]
  %v111 = vld [vmem:[#allocation2 + $0x58] sm:$0xff]
  %v112 = vld [vmem:[#allocation2 + $0x60] sm:$0xff]
  %v113 = vld [vmem:[#allocation2 + $0x68] sm:$0xff]
  %v114 = vld [vmem:[#allocation2 + $0x70] sm:$0xff]
  %v115 = vld [vmem:[#allocation2 + $0x78] sm:$0xff]
  %v116 = vld [vmem:[%s1] sm:$0xf]
  %v117 = vld [vmem:[%s1 + $0x4] sm:$0xf]
  %v118 = vld [vmem:[%s1 + $0x8] sm:$0xf]
  %v119 = vld [vmem:[%s1 + $0xc] sm:$0xf]
  %v120 = vld [vmem:[%s1 + $0x10] sm:$0xf]
  %v121 = vld [vmem:[%s1 + $0x14] sm:$0xf]
  %v122 = vld [vmem:[%s1 + $0x18] sm:$0xf]
  %v123 = vld [vmem:[%s1 + $0x1c] sm:$0xf]
  %v124 = vld [vmem:[%s1 + $0x20] sm:$0xf]
  %v125 = vld [vmem:[%s1 + $0x24] sm:$0xf]
  %v126 = vld [vmem:[%s1 + $0x28] sm:$0xf]
  %v127 = vld [vmem:[%s1 + $0x2c] sm:$0xf]
  %v128 = vld [vmem:[%s1 + $0x30] sm:$0xf]
  %v129 = vld [vmem:[%s1 + $0x34] sm:$0xf]
  %v130 = vld [vmem:[%s1 + $0x38] sm:$0xf]
  %v131 = vld [vmem:[%s1 + $0x3c] sm:$0xf]
  %v148 = vunpack.c.l.b16 %v84
  %v149 = vunpack.c.l.b16 %v85
  %v150 = vunpack.c.l.b16 %v86
  %v151 = vunpack.c.l.b16 %v87
  %v152 = vunpack.c.l.b16 %v88
  %v153 = vunpack.c.l.b16 %v89
  %v154 = vunpack.c.l.b16 %v90
  %v155 = vunpack.c.l.b16 %v91
  %v156 = vunpack.c.l.b16 %v92
  %v157 = vunpack.c.l.b16 %v93
  %v158 = vunpack.c.l.b16 %v94
  %v159 = vunpack.c.l.b16 %v95
  %v160 = vunpack.c.l.b16 %v96
  %v161 = vunpack.c.l.b16 %v97
  %v162 = vunpack.c.l.b16 %v98
  %v163 = vunpack.c.l.b16 %v99
  %v164 = vpack.c.b16 %v149, %v148
  %v165 = vpack.c.b16 %v151, %v150
  %v166 = vpack.c.b16 %v153, %v152
  %v167 = vpack.c.b16 %v155, %v154
  %v168 = vpack.c.b16 %v157, %v156
  %v169 = vpack.c.b16 %v159, %v158
  %v170 = vpack.c.b16 %v161, %v160
  %v171 = vpack.c.b16 %v163, %v162
  %v196 = vunpack.c.l.b16 %v116
  %v197 = vunpack.c.l.b16 %v117
  %v198 = vunpack.c.l.b16 %v118
  %v199 = vunpack.c.l.b16 %v119
  %v200 = vunpack.c.l.b16 %v120
  %v201 = vunpack.c.l.b16 %v121
  %v202 = vunpack.c.l.b16 %v122
  %v203 = vunpack.c.l.b16 %v123
  %v204 = vunpack.c.l.b16 %v124
  %v205 = vunpack.c.l.b16 %v125
  %v206 = vunpack.c.l.b16 %v126
  %v207 = vunpack.c.l.b16 %v127
  %v208 = vunpack.c.l.b16 %v128
  %v209 = vunpack.c.l.b16 %v129
  %v210 = vunpack.c.l.b16 %v130
  %v211 = vunpack.c.l.b16 %v131
  %v212 = vpack.c.b16 %v197, %v196
  %v213 = vpack.c.b16 %v199, %v198
  %v214 = vpack.c.b16 %v201, %v200
  %v215 = vpack.c.b16 %v203, %v202
  %v216 = vpack.c.b16 %v205, %v204
  %v217 = vpack.c.b16 %v207, %v206
  %v218 = vpack.c.b16 %v209, %v208
  %v219 = vpack.c.b16 %v211, %v210
  %228 = vmatprep.subr.bf16.mxu0 0
  %229 = vmatpush1.bf16.msra.mxu0 %v219
  %230 = vmatprep.subr.bf16.mxu0 0
  %231 = vmatpush1.bf16.msra.mxu0 %v218
  %232 = vmatprep.subr.bf16.mxu0 0
  %233 = vmatpush1.bf16.msra.mxu0 %v217
  %234 = vmatprep.subr.bf16.mxu0 0
  %235 = vmatpush1.bf16.msra.mxu0 %v216
  %236 = vmatprep.subr.bf16.mxu0 0
  %237 = vmatpush1.bf16.msra.mxu0 %v215
  %238 = vmatprep.subr.bf16.mxu0 0
  %239 = vmatpush1.bf16.msra.mxu0 %v214
  %240 = vmatprep.subr.bf16.mxu0 0
  %241 = vmatpush1.bf16.msra.mxu0 %v213
  %242 = vmatprep.subr.bf16.mxu0 0
  %243 = vmatpush1.bf16.msra.mxu0 %v212
  %244 = vmatprep.subr.bf16.mxu0 0
  %245 = vmatpush2.bf16.msra.mxu0 0
  %246 = vmatprep.subr.bf16.mxu0 0
  %247 = vmatpush2.bf16.msra.mxu0 0
  %248 = vmatprep.subr.bf16.mxu0 0
  %249 = vmatpush2.bf16.msra.mxu0 0
  %250 = vmatprep.subr.bf16.mxu0 0
  %251 = vmatpush2.bf16.msra.mxu0 0
  %252 = vmatprep.subr.bf16.mxu0 0
  %253 = vmatpush2.bf16.msra.mxu0 0
  %254 = vmatprep.subr.bf16.mxu0 0
  %255 = vmatpush2.bf16.msra.mxu0 0
  %256 = vmatprep.subr.bf16.mxu0 0
  %257 = vmatpush2.bf16.msra.mxu0 0
  %258 = vmatprep.subr.bf16.mxu0 0
  %259 = vmatpush2.bf16.msra.mxu0 0
  %260 = vmatprep.mubr.bf16.mxu0 0
  %261 = vmatmul.mubr.bf16.gmra.mxu0 %v164
  %v262 = vpop.f32.mrf.mxu0
  %v263 = vadd.f32 0.0, %v262
  %v264 = vpop.f32.mrf.mxu0
  %v265 = vpop.f32.mrf.mxu0
  %v266 = vadd.f32 0.0, %v265
  %v267 = vpop.f32.mrf.mxu0
  %268 = vmatprep.mubr.bf16.mxu0 0
  %269 = vmatmul.mubr.bf16.gmra.mxu0 %v165
  %v270 = vpop.f32.mrf.mxu0
  %v271 = vadd.f32 0.0, %v270
  %v272 = vpop.f32.mrf.mxu0
  %v273 = vpop.f32.mrf.mxu0
  %v274 = vadd.f32 0.0, %v273
  %v275 = vpop.f32.mrf.mxu0
  %276 = vmatprep.mubr.bf16.mxu0 0
  %277 = vmatmul.mubr.bf16.gmra.mxu0 %v166
  %v278 = vpop.f32.mrf.mxu0
  %v279 = vadd.f32 0.0, %v278
  %v280 = vpop.f32.mrf.mxu0
  %v281 = vpop.f32.mrf.mxu0
  %v282 = vadd.f32 0.0, %v281
  %v283 = vpop.f32.mrf.mxu0
  %284 = vmatprep.mubr.bf16.mxu0 0
  %285 = vmatmul.mubr.bf16.gmra.mxu0 %v167
  %v286 = vpop.f32.mrf.mxu0
  %v287 = vadd.f32 0.0, %v286
  %v288 = vpop.f32.mrf.mxu0
  %v289 = vpop.f32.mrf.mxu0
  %v290 = vadd.f32 0.0, %v289
  %v291 = vpop.f32.mrf.mxu0
  %292 = vmatprep.mubr.bf16.mxu0 0
  %293 = vmatmul.mubr.bf16.gmra.mxu0 %v168
  %v294 = vpop.f32.mrf.mxu0
  %v295 = vadd.f32 0.0, %v294
  %v296 = vpop.f32.mrf.mxu0
  %v297 = vpop.f32.mrf.mxu0
  %v298 = vadd.f32 0.0, %v297
  %v299 = vpop.f32.mrf.mxu0
  %300 = vmatprep.mubr.bf16.mxu0 0
  %301 = vmatmul.mubr.bf16.gmra.mxu0 %v169
  %v302 = vpop.f32.mrf.mxu0
  %v303 = vadd.f32 0.0, %v302
  %v304 = vpop.f32.mrf.mxu0
  %v305 = vpop.f32.mrf.mxu0
  %v306 = vadd.f32 0.0, %v305
  %v307 = vpop.f32.mrf.mxu0
  %308 = vmatprep.mubr.bf16.mxu0 0
  %309 = vmatmul.mubr.bf16.gmra.mxu0 %v170
  %v310 = vpop.f32.mrf.mxu0
  %v311 = vadd.f32 0.0, %v310
  %v312 = vpop.f32.mrf.mxu0
  %v313 = vpop.f32.mrf.mxu0
  %v314 = vadd.f32 0.0, %v313
  %v315 = vpop.f32.mrf.mxu0
  %316 = vmatprep.mubr.bf16.mxu0 0
  %317 = vmatmul.mubr.bf16.gmra.mxu0 %v171
  %v318 = vpop.f32.mrf.mxu0
  %v319 = vadd.f32 0.0, %v318
  %v320 = vpop.f32.mrf.mxu0
  %v321 = vpop.f32.mrf.mxu0
  %v322 = vadd.f32 0.0, %v321
  %v323 = vpop.f32.mrf.mxu0
  %324 = vdwg.mxu0
  %v325 = vadd.f32 %v100, %v263
  %v326 = vadd.f32 %v101, %v266
  %v327 = vadd.f32 %v102, %v271
  %v328 = vadd.f32 %v103, %v274
  %v329 = vadd.f32 %v104, %v279
  %v330 = vadd.f32 %v105, %v282
  %v331 = vadd.f32 %v106, %v287
  %v332 = vadd.f32 %v107, %v290
  %v333 = vadd.f32 %v108, %v295
  %v334 = vadd.f32 %v109, %v298
  %v335 = vadd.f32 %v110, %v303
  %v336 = vadd.f32 %v111, %v306
  %v337 = vadd.f32 %v112, %v311
  %v338 = vadd.f32 %v113, %v314
  %v339 = vadd.f32 %v114, %v319
  %v340 = vadd.f32 %v115, %v322
  %341 = vst [vmem:[#allocation2] sm:$0xff] %v325
  %342 = vst [vmem:[#allocation2 + $0x8] sm:$0xff] %v326
  %343 = vst [vmem:[#allocation2 + $0x10] sm:$0xff] %v327
  %344 = vst [vmem:[#allocation2 + $0x18] sm:$0xff] %v328
  %345 = vst [vmem:[#allocation2 + $0x20] sm:$0xff] %v329
  %346 = vst [vmem:[#allocation2 + $0x28] sm:$0xff] %v330
  %347 = vst [vmem:[#allocation2 + $0x30] sm:$0xff] %v331
  %348 = vst [vmem:[#allocation2 + $0x38] sm:$0xff] %v332
  %349 = vst [vmem:[#allocation2 + $0x40] sm:$0xff] %v333
  %350 = vst [vmem:[#allocation2 + $0x48] sm:$0xff] %v334
  %351 = vst [vmem:[#allocation2 + $0x50] sm:$0xff] %v335
  %352 = vst [vmem:[#allocation2 + $0x58] sm:$0xff] %v336
  %353 = vst [vmem:[#allocation2 + $0x60] sm:$0xff] %v337
  %354 = vst [vmem:[#allocation2 + $0x68] sm:$0xff] %v338
  %355 = vst [vmem:[#allocation2 + $0x70] sm:$0xff] %v339
  %356 = vst [vmem:[#allocation2 + $0x78] sm:$0xff] %v340
  // Predicated region
  $region14: #{down_forward.2} parent=0 // pred_check
    %p357 = pneg %p16
  $region15: #{down_forward.2} parent=0 // pred_check_branch
    %359 = sbr.rel (%p357) target = $region17
  $region16: #{down_forward.2} parent=0 // pred_region
    %v360 = vld [vmem:[#allocation2] sm:$0xff]
    %v361 = vld [vmem:[#allocation2 + $0x8] sm:$0xff]
    %v362 = vld [vmem:[#allocation2 + $0x10] sm:$0xff]
    %v363 = vld [vmem:[#allocation2 + $0x18] sm:$0xff]
    %v364 = vld [vmem:[#allocation2 + $0x20] sm:$0xff]
    %v365 = vld [vmem:[#allocation2 + $0x28] sm:$0xff]
    %v366 = vld [vmem:[#allocation2 + $0x30] sm:$0xff]
    %v367 = vld [vmem:[#allocation2 + $0x38] sm:$0xff]
    %v368 = vld [vmem:[#allocation2 + $0x40] sm:$0xff]
    %v369 = vld [vmem:[#allocation2 + $0x48] sm:$0xff]
    %v370 = vld [vmem:[#allocation2 + $0x50] sm:$0xff]
    %v371 = vld [vmem:[#allocation2 + $0x58] sm:$0xff]
    %v372 = vld [vmem:[#allocation2 + $0x60] sm:$0xff]
    %v373 = vld [vmem:[#allocation2 + $0x68] sm:$0xff]
    %v374 = vld [vmem:[#allocation2 + $0x70] sm:$0xff]
    %v375 = vld [vmem:[#allocation2 + $0x78] sm:$0xff]
    %v376 = vpack.c.bf16 %v361, %v360
    %v377 = vpack.c.bf16 %v363, %v362
    %v378 = vpack.c.bf16 %v365, %v364
    %v379 = vpack.c.bf16 %v367, %v366
    %v380 = vpack.c.bf16 %v369, %v368
    %v381 = vpack.c.bf16 %v371, %v370
    %v382 = vpack.c.bf16 %v373, %v372
    %v383 = vpack.c.bf16 %v375, %v374
    %v392 = vunpack.c.l.b16 %v376
    %v393 = vunpack.c.h.b16 %v376
    %v394 = vunpack.c.l.b16 %v377
    %v395 = vunpack.c.h.b16 %v377
    %v396 = vunpack.c.l.b16 %v378
    %v397 = vunpack.c.h.b16 %v378
    %v398 = vunpack.c.l.b16 %v379
    %v399 = vunpack.c.h.b16 %v379
    %v400 = vunpack.c.l.b16 %v380
    %v401 = vunpack.c.h.b16 %v380
    %v402 = vunpack.c.l.b16 %v381
    %v403 = vunpack.c.h.b16 %v381
    %v404 = vunpack.c.l.b16 %v382
    %v405 = vunpack.c.h.b16 %v382
    %v406 = vunpack.c.l.b16 %v383
    %v407 = vunpack.c.h.b16 %v383
    %v408 = vpack.c.b16 %v392, %v392
    %v409 = vpack.c.b16 %v393, %v393
    %v410 = vpack.c.b16 %v394, %v394
    %v411 = vpack.c.b16 %v395, %v395
    %v412 = vpack.c.b16 %v396, %v396
    %v413 = vpack.c.b16 %v397, %v397
    %v414 = vpack.c.b16 %v398, %v398
    %v415 = vpack.c.b16 %v399, %v399
    %v416 = vpack.c.b16 %v400, %v400
    %v417 = vpack.c.b16 %v401, %v401
    %v418 = vpack.c.b16 %v402, %v402
    %v419 = vpack.c.b16 %v403, %v403
    %v420 = vpack.c.b16 %v404, %v404
    %v421 = vpack.c.b16 %v405, %v405
    %v422 = vpack.c.b16 %v406, %v406
    %v423 = vpack.c.b16 %v407, %v407
    %440 = vst [vmem:[%s2] sm:$0xf] %v408
    %441 = vst [vmem:[%s2 + $0x4] sm:$0xf] %v409
    %442 = vst [vmem:[%s2 + $0x8] sm:$0xf] %v410
    %443 = vst [vmem:[%s2 + $0xc] sm:$0xf] %v411
    %444 = vst [vmem:[%s2 + $0x10] sm:$0xf] %v412
    %445 = vst [vmem:[%s2 + $0x14] sm:$0xf] %v413
    %446 = vst [vmem:[%s2 + $0x18] sm:$0xf] %v414
    %447 = vst [vmem:[%s2 + $0x1c] sm:$0xf] %v415
    %448 = vst [vmem:[%s2 + $0x20] sm:$0xf] %v416
    %449 = vst [vmem:[%s2 + $0x24] sm:$0xf] %v417
    %450 = vst [vmem:[%s2 + $0x28] sm:$0xf] %v418
    %451 = vst [vmem:[%s2 + $0x2c] sm:$0xf] %v419
    %452 = vst [vmem:[%s2 + $0x30] sm:$0xf] %v420
    %453 = vst [vmem:[%s2 + $0x34] sm:$0xf] %v421
    %454 = vst [vmem:[%s2 + $0x38] sm:$0xf] %v422
    %455 = vst [vmem:[%s2 + $0x3c] sm:$0xf] %v423
    %v456 = vadd.f32 %v360, %v361
    %v457 = vadd.f32 %v456, %v362
    %v458 = vadd.f32 %v457, %v363
    %v459 = vadd.f32 %v458, %v364
    %v460 = vadd.f32 %v459, %v365
    %v461 = vadd.f32 %v460, %v366
    %v462 = vadd.f32 %v461, %v367
    %v463 = vadd.f32 %v462, %v368
    %v464 = vadd.f32 %v463, %v369
    %v465 = vadd.f32 %v464, %v370
    %v466 = vadd.f32 %v465, %v371
    %v467 = vadd.f32 %v466, %v372
    %v468 = vadd.f32 %v467, %v373
    %v469 = vadd.f32 %v468, %v374
    %v470 = vadd.f32 %v469, %v375
    %v471 = vrot.slane %v470, 4
    %v472 = vadd.f32 %v470, %v471
    %v473 = vrot.slane %v472, 2
    %v474 = vadd.f32 %v472, %v473
    %v475 = vrot.slane %v474, 1
    %v476 = vadd.f32 %v474, %v475
    %477 = vst [vmem:[%s3] sm:$0x1] %v476
    %v478 = vmul.f32 %v360, %v360
    %v479 = vmul.f32 %v361, %v361
    %v480 = vmul.f32 %v362, %v362
    %v481 = vmul.f32 %v363, %v363
    %v482 = vmul.f32 %v364, %v364
    %v483 = vmul.f32 %v365, %v365
    %v484 = vmul.f32 %v366, %v366
    %v485 = vmul.f32 %v367, %v367
    %v486 = vmul.f32 %v368, %v368
    %v487 = vmul.f32 %v369, %v369
    %v488 = vmul.f32 %v370, %v370
    %v489 = vmul.f32 %v371, %v371
    %v490 = vmul.f32 %v372, %v372
    %v491 = vmul.f32 %v373, %v373
    %v492 = vmul.f32 %v374, %v374
    %v493 = vmul.f32 %v375, %v375
    %v494 = vadd.f32 %v478, %v479
    %v495 = vadd.f32 %v494, %v480
    %v496 = vadd.f32 %v495, %v481
    %v497 = vadd.f32 %v496, %v482
    %v498 = vadd.f32 %v497, %v483
    %v499 = vadd.f32 %v498, %v484
    %v500 = vadd.f32 %v499, %v485
    %v501 = vadd.f32 %v500, %v486
    %v502 = vadd.f32 %v501, %v487
    %v503 = vadd.f32 %v502, %v488
    %v504 = vadd.f32 %v503, %v489
    %v505 = vadd.f32 %v504, %v490
    %v506 = vadd.f32 %v505, %v491
    %v507 = vadd.f32 %v506, %v492
    %v508 = vadd.f32 %v507, %v493
    %v509 = vrot.slane %v508, 4
    %v510 = vadd.f32 %v508, %v509
    %v511 = vrot.slane %v510, 2
    %v512 = vadd.f32 %v510, %v511
    %v513 = vrot.slane %v512, 1
    %v514 = vadd.f32 %v512, %v513
    %515 = vst [vmem:[%s4] sm:$0x1] %v514
  $region17: #{down_forward.2} parent=0 // pred_fallthru
    _
  // Predicated region
  $region18: #{down_forward.2} parent=0 // pred_check
    _
  $region19: #{down_forward.2} parent=0 // pred_check_branch
    %517 = sbr.rel (0) target = $region21
  $region20: #{down_forward.2} parent=0 // pred_region
    _
  $region21: #{down_forward.2} parent=0 // pred_fallthru
    _
  // Predicated region
  $region22: #{down_forward.2} parent=0 // pred_check
    _
  $region23: #{down_forward.2} parent=0 // pred_check_branch
    %519 = sbr.rel (0) target = $region25
  $region24: #{down_forward.2} parent=0 // pred_region
    _
  $region25: #{down_forward.2} parent=0 // pred_fallthru
    _
  // Predicated region
  $region26: #{down_forward.2} parent=0 // pred_check
    _
  $region27: #{down_forward.2} parent=0 // pred_check_branch
    %521 = sbr.rel (0) target = $region29
  $region28: #{down_forward.2} parent=0 // pred_region
    _
  $region29: #{down_forward.2} parent=0 // pred_fallthru
    _
  // Predicated region
  $region30: #{down_forward.2} parent=0 // pred_check
    _
  $region31: #{down_forward.2} parent=0 // pred_check_branch
    %523 = sbr.rel (0) target = $region33
  $region32: #{down_forward.2} parent=0 // pred_region
    _
  $region33: #{down_forward.2} parent=0 // pred_fallthru
    _
  // Predicated region
  $region34: #{down_forward.2} parent=0 // pred_check
    _
  $region35: #{down_forward.2} parent=0 // pred_check_branch
    %525 = sbr.rel (0) target = $region37
  $region36: #{down_forward.2} parent=0 // pred_region
    _
  $region37: #{down_forward.2} parent=0 // pred_fallthru
    _
  // Predicated region
  $region38: #{down_forward.2} parent=0 // pred_check
    _
  $region39: #{down_forward.2} parent=0 // pred_check_branch
    %527 = sbr.rel (0) target = $region41
  $region40: #{down_forward.2} parent=0 // pred_region
    _
  $region41: #{down_forward.2} parent=0 // pred_fallthru
    _

</llo_original>
